<compile_context>
chip_gen: v5e
topology: v5e:2x2
jax: 0.10.0
libtpu: 0.0.40
codegen_flags: <defaults>
</compile_context>

<pallas_src>
import numpy as np
import jax
import jax.numpy as jnp
from jax import lax
from jax.experimental import pallas as pl
from jax.experimental.pallas import tpu as pltpu

# --- HybridLoss hyper-parameters (module defaults) ---------------------------
ALPHA = 0.5
BETA = 0.3
TEMPERATURE = 0.07          # SupConLoss temperature
BASE_TEMPERATURE = 0.07     # SupConLoss default base_temperature
ADASP_TEMP = 0.04           # AdaSPLoss temp
_EPS = 1e-12                # torch.nn.functional.normalize eps
_TINY = 1e-30               # guard against exp() underflow (structural zeros)


# --- MXU helpers: default precision, f32 accumulation ------------------------
def _mm(a, b):        # a @ b
    return lax.dot_general(a, b, (((1,), (0,)), ((), ())),
                           preferred_element_type=jnp.float32)


def _mm_nt(a, b):     # a @ b.T   (no explicit transpose)
    return lax.dot_general(a, b, (((1,), (1,)), ((), ())),
                           preferred_element_type=jnp.float32)


def _mm_tn(a, b):     # a.T @ b   (no explicit transpose)
    return lax.dot_general(a, b, (((0,), (0,)), ((), ())),
                           preferred_element_type=jnp.float32)


# --- the fused kernel ---------------------------------------------------------
def _make_kernel(B, NID, NINS, TILE_C):
    scale = 1.0 / ADASP_TEMP

    def kernel(lab_r_ref, lab_c_ref, lab_ce_ref, inv_r_ref, inv_c_ref,
               y_proj_ref, y_pred_ref, out_ref,
               m_acc, s_acc, p_acc, sa_acc):
        c = pl.program_id(0)
        nc = pl.num_programs(0)

        # ---------------- step 0: init CE accumulators + SupCon/AdaSP --------
        @pl.when(c == 0)
        def _():
            m_acc[...] = jnp.full((B, 1), -1e30, jnp.float32)
            s_acc[...] = jnp.zeros((B, 1), jnp.float32)
            p_acc[...] = jnp.zeros((B, 1), jnp.float32)

            y = y_proj_ref[...]                                     # (B, D)
            # single shared Gram matrix
            gram = _mm_nt(y, y)                                     # (B, B)

            same = (lab_r_ref[...] == lab_c_ref[...]).astype(jnp.float32)
            rows = lax.broadcasted_iota(jnp.int32, (B, B), 0)
            cols = lax.broadcasted_iota(jnp.int32, (B, B), 1)
            not_self = (rows != cols).astype(jnp.float32)           # 1 - eye(B)
            pos_mask = same * not_self

            # ---- SupConLoss (n_views=1, contrast_mode='all') ----
            adc = gram * (1.0 / TEMPERATURE)
            logits = adc - jnp.max(adc, axis=1, keepdims=True)
            exp_l = jnp.exp(logits) * not_self
            log_prob = logits - jnp.log(jnp.sum(exp_l, axis=1, keepdims=True))
            pos_cnt = jnp.sum(pos_mask, axis=1, keepdims=True)
            pos_sum = jnp.sum(pos_mask * log_prob, axis=1, keepdims=True)
            # guarded 0/0 (rows with no positive contribute 0, not NaN)
            mlpp = pos_sum * pl.reciprocal(jnp.maximum(pos_cnt, 1.0),
                                           approx=True)
            supcon = (-(TEMPERATURE / BASE_TEMPERATURE) / B) * \
                     jnp.sum(mlpp, axis=0, keepdims=True)           # (1,1)

            # ---- AdaSPLoss ('adasp') ----
            # normalized similarities from the shared Gram (f32 inv norms
            # precomputed in the wrapper in both layouts)
            sf = gram * inv_r_ref[...] * inv_c_ref[...] * scale     # (B,B)
            # kron(eye(N_id), -ones) with zeros->1  ==  1 - 2*same
            # (host asserts that labels form N_id contiguous groups of N_ins)
            mask_hh = 1.0 - 2.0 * same
            e_sim = jnp.exp(sf * mask_hh)                           # (B,B)

            # membership (B, N_id) built from iota, no host array / no int div
            row_i = lax.broadcasted_iota(jnp.int32, (B, NID), 0)
            grp_lo = lax.broadcasted_iota(jnp.int32, (B, NID), 1) * NINS
            member = ((row_i >= grp_lo) &
                      (row_i < grp_lo + NINS)).astype(jnp.float32)

            em = _mm(e_sim, member)                                 # (B, NID)
            id_hh = _mm_tn(member, em)                              # (NID,NID)

            ir = lax.broadcasted_iota(jnp.int32, (NID, NID), 0)
            ic = lax.broadcasted_iota(jnp.int32, (NID, NID), 1)
            eye_id = (ir == ic).astype(jnp.float32)

            diag_hh = jnp.sum(id_hh * eye_id, axis=1, keepdims=True)
            l_sim = -jnp.log(jnp.maximum(diag_hh, _TINY))           # (NID,1)

            inv_em = pl.reciprocal(jnp.maximum(em, _TINY), approx=True)
            he = em * (1.0 - member) + inv_em * member              # (B,NID)
            id_he = _mm_tn(member, he)                              # (NID,NID)
            diag_he = jnp.sum(id_he * eye_id, axis=1, keepdims=True)
            s_sim = jnp.log(jnp.maximum(diag_he, _TINY))

            w_hh = l_sim * (1.0 / scale)
            w_he = s_sim * (1.0 / scale)
            wt = 2.0 * w_he * w_hh / (w_hh + w_he)
            wt = jnp.where(w_hh < 0.0, 0.0, wt)
            both = l_sim * wt + s_sim * (1.0 - wt)
            exp_both = jnp.exp(both)                                # (NID,1)

            # L1 row-norm of [exp(both) on diag | id_he off-diag]; all > 0
            row_l1 = jnp.maximum(
                exp_both + jnp.sum(id_he, axis=1, keepdims=True) - diag_he,
                _EPS)
            diag_l1 = exp_both * pl.reciprocal(row_l1, approx=True)
            adasp = (-1.0 / NID) * jnp.sum(jnp.log(diag_l1), axis=0,
                                           keepdims=True)          # (1,1)

            sa_acc[...] = ALPHA * supcon + BETA * adasp

        # ---------------- every step: online CE over one class tile ----------
        logits_t = y_pred_ref[...]                                  # (B,TILE_C)
        t_max = jnp.max(logits_t, axis=1, keepdims=True)
        m_new = jnp.maximum(m_acc[...], t_max)
        s_acc[...] = s_acc[...] * jnp.exp(m_acc[...] - m_new) + \
                     jnp.sum(jnp.exp(logits_t - m_new), axis=1, keepdims=True)
        m_acc[...] = m_new
        cls = c * TILE_C + lax.broadcasted_iota(jnp.int32, (B, TILE_C), 1)
        hit = cls == lab_ce_ref[...]
        p_acc[...] += jnp.sum(jnp.where(hit, logits_t, 0.0), axis=1,
                              keepdims=True)

        # ---------------- last step: finalize & combine ----------------------
        @pl.when(c == nc - 1)
        def _():
            lse = m_acc[...] + jnp.log(s_acc[...])                  # (B,1)
            ce = jnp.sum(lse - p_acc[...], axis=0, keepdims=True) * (1.0 / B)
            out_ref[...] = sa_acc[...] + (1.0 - ALPHA - BETA) * ce

    return kernel


# --- wrapper ------------------------------------------------------------------
def hybrid_loss_pallas(y_proj, y_pred, label, label_vec):
    y_proj = jnp.asarray(y_proj, jnp.float32)
    y_pred = jnp.asarray(y_pred, jnp.float32)
    B, D = y_proj.shape
    C = int(y_pred.shape[1])

    # ---- host-side label handling (N_id is shape-determining: must be static)
    lab_np = np.asarray(label).reshape(-1).astype(np.int32)
    assert lab_np.shape[0] == B
    n_id = int(np.unique(lab_np).size)
    assert B % n_id == 0, "AdaSP requires equal-size identity groups"
    n_ins = B // n_id
    grp = lab_np.reshape(n_id, n_ins)
    assert np.all(grp == grp[:, :1]) and np.unique(grp[:, 0]).size == n_id, \
        "AdaSP requires the batch sorted into N_id contiguous groups of N_ins"
    # TODO(synk): torch.unique on device -> here it must stay host-side, since
    # N_id fixes the shapes of the AdaSP intermediates.

    lab_dev = jnp.asarray(lab_np)
    lab_row = lab_dev.reshape(B, 1)
    lab_col = lab_dev.reshape(1, B)
    lab_ce = jnp.argmax(jnp.asarray(label_vec), axis=1).astype(jnp.int32)
    lab_ce = lab_ce.reshape(B, 1)

    # f32 inverse L2-norms in both layouts -> the single in-kernel Gram matmul
    # serves both the raw (SupCon) and normalized (AdaSP) similarity matrices.
    inv_n = lax.rsqrt(jnp.maximum(jnp.sum(y_proj * y_proj, axis=1),
                                  _EPS * _EPS))
    inv_r = inv_n.reshape(B, 1)
    inv_c = inv_n.reshape(1, B)

    # ---- class-dimension tiling for the CE term (online logsumexp) ----------
    max_tile = 512
    if C <= max_tile:
        tile_c, y_pred_p = C, y_pred
    else:
        tile_c = max_tile
        c_pad = int(pl.cdiv(C, tile_c)) * tile_c
        y_pred_p = jnp.pad(y_pred, ((0, 0), (0, c_pad - C)),
                           constant_values=-1e30)
    num_c = int(y_pred_p.shape[1]) // tile_c

    kernel = _make_kernel(B, n_id, n_ins, tile_c)

    # scoped VMEM sized to the actual footprint (double-buffered y_pred tile +
    # resident small blocks + (B,B)-sized intermediates) with headroom.
    est = 4 * (2 * B * tile_c + B * D + 6 * B * B + 4 * B * n_id + 16 * B)
    vmem_bytes = int(min(64 * 2 ** 20, max(16 * 2 ** 20, 4 * est)))

    out = pl.pallas_call(
        kernel,
        out_shape=jax.ShapeDtypeStruct((1, 1), jnp.float32),
        grid=(num_c,),
        in_specs=[
            pl.BlockSpec((B, 1), lambda c: (0, 0)),        # labels (rows)
            pl.BlockSpec((1, B), lambda c: (0, 0)),        # labels (cols)
            pl.BlockSpec((B, 1), lambda c: (0, 0)),        # CE target class ids
            pl.BlockSpec((B, 1), lambda c: (0, 0)),        # 1/||y|| (rows)
            pl.BlockSpec((1, B), lambda c: (0, 0)),        # 1/||y|| (cols)
            pl.BlockSpec((B, D), lambda c: (0, 0)),        # y_proj
            pl.BlockSpec((B, tile_c), lambda c: (0, c)),   # y_pred class tile
        ],
        out_specs=pl.BlockSpec((1, 1), lambda c: (0, 0)),
        scratch_shapes=[pltpu.VMEM((B, 1), jnp.float32),   # m (online max)
                        pltpu.VMEM((B, 1), jnp.float32),   # s (online sumexp)
                        pltpu.VMEM((B, 1), jnp.float32),   # picked target logit
                        pltpu.VMEM((1, 1), jnp.float32)],  # alpha*sup + beta*adasp
        compiler_params=pltpu.CompilerParams(
            dimension_semantics=("arbitrary",),
            vmem_limit_bytes=vmem_bytes),
    )(lab_row, lab_col, lab_ce, inv_r, inv_c, y_proj, y_pred_p)
    return out[0, 0]


# --- pure-JAX reference (canonical SupCon / AdaSP / CE formulas) --------------
def hybrid_loss_reference(y_proj, y_pred, label, label_vec):
    y_proj = jnp.asarray(y_proj, jnp.float32)
    y_pred = jnp.asarray(y_pred, jnp.float32)
    lab = jnp.asarray(label).reshape(-1)
    B = y_proj.shape[0]
    n_id = int(np.unique(np.asarray(label)).size)
    n_ins = B // n_id

    eye_b = jnp.eye(B, dtype=jnp.float32)
    logits_mask = 1.0 - eye_b
    same = (lab[:, None] == lab[None, :]).astype(jnp.float32)
    mask = same * logits_mask

    # SupConLoss
    adc = jnp.matmul(y_proj, y_proj.T) / TEMPERATURE
    logits = adc - jnp.max(adc, axis=1, keepdims=True)
    exp_l = jnp.exp(logits) * logits_mask
    log_prob = logits - jnp.log(jnp.sum(exp_l, axis=1, keepdims=True))
    mlpp = jnp.sum(mask * log_prob, axis=1) / jnp.maximum(jnp.sum(mask, axis=1),
                                                          1.0)
    supcon = -(TEMPERATURE / BASE_TEMPERATURE) * jnp.mean(mlpp)

    # AdaSPLoss ('adasp')
    scale = 1.0 / ADASP_TEMP
    feats_n = y_proj / jnp.maximum(
        jnp.linalg.norm(y_proj, axis=1, keepdims=True), _EPS)
    sf = jnp.matmul(feats_n, feats_n.T) * scale
    member = jnp.asarray(np.kron(np.eye(n_id), np.ones((n_ins, 1))), jnp.float32)
    mask_hh = jnp.asarray(np.kron(np.eye(n_id), -np.ones((n_ins, n_ins))),
                          jnp.float32)
    mask_hh = jnp.where(mask_hh == 0.0, 1.0, mask_hh)
    e_sim = jnp.exp(sf * mask_hh)
    em = jnp.matmul(e_sim, member)
    id_hh = jnp.matmul(member.T, em)
    eye_id = jnp.eye(n_id, dtype=jnp.float32)
    diag_hh = jnp.sum(id_hh * eye_id, axis=1)
    l_sim = -jnp.log(jnp.maximum(diag_hh, _TINY))
    he = em * (1.0 - member) + (1.0 / jnp.maximum(em, _TINY)) * member
    id_he = jnp.matmul(member.T, he)
    diag_he = jnp.sum(id_he * eye_id, axis=1)
    s_sim = jnp.log(jnp.maximum(diag_he, _TINY))
    w_hh = l_sim / scale
    w_he = s_sim / scale
    wt = 2.0 * w_he * w_hh / (w_hh + w_he)
    wt = jnp.where(w_hh < 0.0, 0.0, wt)
    both = l_sim * wt + s_sim * (1.0 - wt)
    adaptive = jnp.exp(both)[:, None] * eye_id + id_he * (1.0 - eye_id)
    row_l1 = jnp.maximum(jnp.sum(jnp.abs(adaptive), axis=1), _EPS)
    adasp = -jnp.mean(jnp.log(jnp.exp(both) / row_l1))

    # CrossEntropy with one-hot target
    tgt = jnp.argmax(jnp.asarray(label_vec), axis=1)
    lse = jax.nn.logsumexp(y_pred, axis=1)
    picked = jnp.take_along_axis(y_pred, tgt[:, None], axis=1)[:, 0]
    ce = jnp.mean(lse - picked)

    return ALPHA * supcon + BETA * adasp + (1.0 - ALPHA - BETA) * ce


if __name__ == "__main__":
    key = jax.random.PRNGKey(0)
    B, D, C = 8, 32, 4          # batch, feature dim, num classes
    N_id, N_ins = 4, 2          # identities x instances (blocked batch layout)

    k1, k2 = jax.random.split(key)
    y_proj = jax.random.normal(k1, (B, D), jnp.float32)
    y_proj = y_proj / jnp.linalg.norm(y_proj, axis=1, keepdims=True)
    y_pred = jax.random.normal(k2, (B, C), jnp.float32)

    # identity labels, contiguous equal-size blocks (required by AdaSP)
    label = jnp.repeat(jnp.arange(N_id, dtype=jnp.int32), N_ins).reshape(B, 1)
    # one-hot class targets for the cross-entropy term
    label_vec = jax.nn.one_hot(jnp.array([0, 1, 2, 3, 0, 1, 2, 3], jnp.int32),
                               C, dtype=jnp.float32)

    out = jax.block_until_ready(
        hybrid_loss_pallas(y_proj, y_pred, label, label_vec))
    ref = jax.block_until_ready(
        hybrid_loss_reference(y_proj, y_pred, label, label_vec))

    assert np.isfinite(float(out)), f"non-finite kernel output: {out}"
    assert abs(float(out) - float(ref)) <= 5e-3 * max(1.0, abs(float(ref))), \
        f"mismatch: pallas={float(out)} ref={float(ref)}"

    print("KERNEL_OK")
</pallas_src>

<mosaic_0001>
module attributes {stable_mosaic.version = 11 : i64} {
  func.func @kernel(%arg0: i32, %arg1: memref<8x1xi32, #tpu.memory_space<vmem>>, %arg2: memref<1x8xi32, #tpu.memory_space<vmem>>, %arg3: memref<8x1xi32, #tpu.memory_space<vmem>>, %arg4: memref<8x1xf32, #tpu.memory_space<vmem>>, %arg5: memref<1x8xf32, #tpu.memory_space<vmem>>, %arg6: memref<8x32xf32, #tpu.memory_space<vmem>>, %arg7: memref<8x4xf32, #tpu.memory_space<vmem>>, %arg8: memref<1x1xf32, #tpu.memory_space<vmem>>, %arg9: memref<8x1xf32, #tpu.memory_space<vmem>>, %arg10: memref<8x1xf32, #tpu.memory_space<vmem>>, %arg11: memref<8x1xf32, #tpu.memory_space<vmem>>, %arg12: memref<1x1xf32, #tpu.memory_space<vmem>>) attributes {dimension_semantics = [#tpu.dimension_semantics<arbitrary>], iteration_bounds = array<i64: 1>, scalar_prefetch = 0 : i64, scratch_operands = 4 : i64, tpu.core_type = #tpu.core_type<tc>, window_params = [{pipeline_mode = #tpu.pipeline_mode<synchronous>, transform_indices = @transform_0, window_bounds = array<i64: 8, 1>}, {pipeline_mode = #tpu.pipeline_mode<synchronous>, transform_indices = @transform_1, window_bounds = array<i64: 1, 8>}, {pipeline_mode = #tpu.pipeline_mode<synchronous>, transform_indices = @transform_2, window_bounds = array<i64: 8, 1>}, {pipeline_mode = #tpu.pipeline_mode<synchronous>, transform_indices = @transform_3, window_bounds = array<i64: 8, 1>}, {pipeline_mode = #tpu.pipeline_mode<synchronous>, transform_indices = @transform_4, window_bounds = array<i64: 1, 8>}, {pipeline_mode = #tpu.pipeline_mode<synchronous>, transform_indices = @transform_5, window_bounds = array<i64: 8, 32>}, {transform_indices = @transform_6, window_bounds = array<i64: 8, 4>}, {pipeline_mode = #tpu.pipeline_mode<synchronous>, transform_indices = @transform_7, window_bounds = array<i64: 1, 1>}]} {
    %c0_i32 = arith.constant 0 : i32
    %0 = arith.cmpi eq, %arg0, %c0_i32 : i32
    %1 = arith.extui %0 : i1 to i32
    %c0_i32_0 = arith.constant 0 : i32
    %2 = arith.cmpi ne, %1, %c0_i32_0 : i32
    scf.if %2 {
      %cst_23 = arith.constant -1.000000e+30 : f32
      %38 = vector.broadcast %cst_23 : f32 to vector<8x1xf32>
      %c0_24 = arith.constant 0 : index
      %c0_25 = arith.constant 0 : index
      %39 = vector.load %arg9[%c0_24, %c0_25] : memref<8x1xf32, #tpu.memory_space<vmem>>, vector<8x1xf32>
      tpu.vector_store %arg9[%c0_24, %c0_25], %38 {strides = array<i32>} : memref<8x1xf32, #tpu.memory_space<vmem>>, vector<8x1xf32>,
      %cst_26 = arith.constant 0.000000e+00 : f32
      %40 = vector.broadcast %cst_26 : f32 to vector<8x1xf32>
      %c0_27 = arith.constant 0 : index
      %c0_28 = arith.constant 0 : index
      %41 = vector.load %arg10[%c0_27, %c0_28] : memref<8x1xf32, #tpu.memory_space<vmem>>, vector<8x1xf32>
      tpu.vector_store %arg10[%c0_27, %c0_28], %40 {strides = array<i32>} : memref<8x1xf32, #tpu.memory_space<vmem>>, vector<8x1xf32>,
      %cst_29 = arith.constant 0.000000e+00 : f32
      %42 = vector.broadcast %cst_29 : f32 to vector<8x1xf32>
      %c0_30 = arith.constant 0 : index
      %c0_31 = arith.constant 0 : index
      %43 = vector.load %arg11[%c0_30, %c0_31] : memref<8x1xf32, #tpu.memory_space<vmem>>, vector<8x1xf32>
      tpu.vector_store %arg11[%c0_30, %c0_31], %42 {strides = array<i32>} : memref<8x1xf32, #tpu.memory_space<vmem>>, vector<8x1xf32>,
      %c0_32 = arith.constant 0 : index
      %c0_33 = arith.constant 0 : index
      %44 = vector.load %arg6[%c0_32, %c0_33] : memref<8x32xf32, #tpu.memory_space<vmem>>, vector<8x32xf32>
      %cst_34 = arith.constant dense<0.000000e+00> : vector<8x8xf32>
      %45 = tpu.matmul %44, %44, %cst_34 {dimension_numbers = #tpu.dot_dimension_numbers<[1], [1], [0], [0], [0, 0, 1, 0], [], []>} : vector<8x32xf32>, vector<8x32xf32>, vector<8x8xf32> -> vector<8x8xf32>
      %c0_35 = arith.constant 0 : index
      %c0_36 = arith.constant 0 : index
      %46 = vector.load %arg1[%c0_35, %c0_36] : memref<8x1xi32, #tpu.memory_space<vmem>>, vector<8x1xi32>
      %c0_37 = arith.constant 0 : index
      %c0_38 = arith.constant 0 : index
      %47 = vector.load %arg2[%c0_37, %c0_38] : memref<1x8xi32, #tpu.memory_space<vmem>>, vector<1x8xi32>
      %48 = vector.broadcast %46 : vector<8x1xi32> to vector<8x8xi32>
      %49 = vector.broadcast %47 : vector<1x8xi32> to vector<8x8xi32>
      %50 = arith.cmpi eq, %48, %49 : vector<8x8xi32>
      %51 = arith.extui %50 : vector<8x8xi1> to vector<8x8xi32>
      %52 = arith.sitofp %51 : vector<8x8xi32> to vector<8x8xf32>
      %53 = tpu.iota {dimensions = array<i32: 0>} : vector<8x8xi32>
      %54 = tpu.iota {dimensions = array<i32: 1>} : vector<8x8xi32>
      %55 = arith.cmpi ne, %53, %54 : vector<8x8xi32>
      %56 = arith.extui %55 : vector<8x8xi1> to vector<8x8xi32>
      %57 = arith.sitofp %56 : vector<8x8xi32> to vector<8x8xf32>
      %58 = arith.mulf %52, %57 : vector<8x8xf32>
      %cst_39 = arith.constant 14.2857141 : f32
      %59 = vector.broadcast %cst_39 : f32 to vector<8x8xf32>
      %60 = arith.mulf %45, %59 : vector<8x8xf32>
      %cst_40 = arith.constant dense<0xFF800000> : vector<8xf32>
      %61 = vector.multi_reduction <maximumf>, %60, %cst_40 [1] : vector<8x8xf32> to vector<8xf32>
      %62 = vector.shape_cast %61 : vector<8xf32> to vector<8x1xf32>
      %63 = vector.broadcast %62 : vector<8x1xf32> to vector<8x8xf32>
      %64 = arith.subf %60, %63 : vector<8x8xf32>
      %65 = math.exp %64 : vector<8x8xf32>
      %66 = arith.mulf %65, %57 : vector<8x8xf32>
      %cst_41 = arith.constant dense<0.000000e+00> : vector<8xf32>
      %67 = vector.multi_reduction <add>, %66, %cst_41 [1] : vector<8x8xf32> to vector<8xf32>
      %68 = vector.shape_cast %67 : vector<8xf32> to vector<8x1xf32>
      %69 = math.log %68 : vector<8x1xf32>
      %70 = vector.broadcast %69 : vector<8x1xf32> to vector<8x8xf32>
      %71 = arith.subf %64, %70 : vector<8x8xf32>
      %cst_42 = arith.constant dense<0.000000e+00> : vector<8xf32>
      %72 = vector.multi_reduction <add>, %58, %cst_42 [1] : vector<8x8xf32> to vector<8xf32>
      %73 = vector.shape_cast %72 : vector<8xf32> to vector<8x1xf32>
      %74 = arith.mulf %58, %71 : vector<8x8xf32>
      %cst_43 = arith.constant dense<0.000000e+00> : vector<8xf32>
      %75 = vector.multi_reduction <add>, %74, %cst_43 [1] : vector<8x8xf32> to vector<8xf32>
      %76 = vector.shape_cast %75 : vector<8xf32> to vector<8x1xf32>
      %cst_44 = arith.constant 1.000000e+00 : f32
      %77 = vector.broadcast %cst_44 : f32 to vector<8x1xf32>
      %78 = arith.maximumf %73, %77 : vector<8x1xf32>
      %79 = tpu.reciprocal %78 {approx = true} : vector<8x1xf32> -> vector<8x1xf32>
      %80 = arith.mulf %76, %79 : vector<8x1xf32>
      %cst_45 = arith.constant dense<0.000000e+00> : vector<1xf32>
      %81 = vector.multi_reduction <add>, %80, %cst_45 [0] : vector<8x1xf32> to vector<1xf32>
      %82 = vector.shape_cast %81 : vector<1xf32> to vector<1x1xf32>
      %cst_46 = arith.constant -1.250000e-01 : f32
      %83 = vector.broadcast %cst_46 : f32 to vector<1x1xf32>
      %84 = arith.mulf %83, %82 : vector<1x1xf32>
      %c0_47 = arith.constant 0 : index
      %c0_48 = arith.constant 0 : index
      %85 = vector.load %arg4[%c0_47, %c0_48] : memref<8x1xf32, #tpu.memory_space<vmem>>, vector<8x1xf32>
      %86 = vector.broadcast %85 : vector<8x1xf32> to vector<8x8xf32>
      %87 = arith.mulf %45, %86 : vector<8x8xf32>
      %c0_49 = arith.constant 0 : index
      %c0_50 = arith.constant 0 : index
      %88 = vector.load %arg5[%c0_49, %c0_50] : memref<1x8xf32, #tpu.memory_space<vmem>>, vector<1x8xf32>
      %89 = vector.broadcast %88 : vector<1x8xf32> to vector<8x8xf32>
      %90 = arith.mulf %87, %89 : vector<8x8xf32>
      %cst_51 = arith.constant 2.500000e+01 : f32
      %91 = vector.broadcast %cst_51 : f32 to vector<8x8xf32>
      %92 = arith.mulf %90, %91 : vector<8x8xf32>
      %cst_52 = arith.constant 2.000000e+00 : f32
      %93 = vector.broadcast %cst_52 : f32 to vector<8x8xf32>
      %94 = arith.mulf %93, %52 : vector<8x8xf32>
      %cst_53 = arith.constant 1.000000e+00 : f32
      %95 = vector.broadcast %cst_53 : f32 to vector<8x8xf32>
      %96 = arith.subf %95, %94 : vector<8x8xf32>
      %97 = arith.mulf %92, %96 : vector<8x8xf32>
      %98 = math.exp %97 : vector<8x8xf32>
      %99 = tpu.iota {dimensions = array<i32: 0>} : vector<8x4xi32>
      %100 = tpu.iota {dimensions = array<i32: 1>} : vector<8x4xi32>
      %c2_i32 = arith.constant 2 : i32
      %101 = vector.broadcast %c2_i32 : i32 to vector<8x4xi32>
      %102 = arith.muli %100, %101 : vector<8x4xi32>
      %103 = arith.cmpi sge, %99, %102 : vector<8x4xi32>
      %c2_i32_54 = arith.constant 2 : i32
      %104 = vector.broadcast %c2_i32_54 : i32 to vector<8x4xi32>
      %105 = arith.addi %102, %104 : vector<8x4xi32>
      %106 = arith.cmpi slt, %99, %105 : vector<8x4xi32>
      %107 = arith.andi %103, %106 : vector<8x4xi1>
      %108 = arith.extui %107 : vector<8x4xi1> to vector<8x4xi32>
      %109 = arith.sitofp %108 : vector<8x4xi32> to vector<8x4xf32>
      %cst_55 = arith.constant dense<0.000000e+00> : vector<8x4xf32>
      %110 = tpu.matmul %98, %109, %cst_55 {dimension_numbers = #tpu.dot_dimension_numbers<[1], [0], [0], [1], [0, 0, 1, 1], [], []>} : vector<8x8xf32>, vector<8x4xf32>, vector<8x4xf32> -> vector<8x4xf32>
      %cst_56 = arith.constant dense<0.000000e+00> : vector<4x4xf32>
      %111 = tpu.matmul %109, %110, %cst_56 {dimension_numbers = #tpu.dot_dimension_numbers<[0], [0], [1], [1], [0, 1, 1, 1], [], []>} : vector<8x4xf32>, vector<8x4xf32>, vector<4x4xf32> -> vector<4x4xf32>
      %112 = tpu.iota {dimensions = array<i32: 0>} : vector<4x4xi32>
      %113 = tpu.iota {dimensions = array<i32: 1>} : vector<4x4xi32>
      %114 = arith.cmpi eq, %112, %113 : vector<4x4xi32>
      %115 = arith.extui %114 : vector<4x4xi1> to vector<4x4xi32>
      %116 = arith.sitofp %115 : vector<4x4xi32> to vector<4x4xf32>
      %117 = arith.mulf %111, %116 : vector<4x4xf32>
      %cst_57 = arith.constant dense<0.000000e+00> : vector<4xf32>
      %118 = vector.multi_reduction <add>, %117, %cst_57 [1] : vector<4x4xf32> to vector<4xf32>
      %119 = vector.shape_cast %118 : vector<4xf32> to vector<4x1xf32>
      %cst_58 = arith.constant 1.000000e-30 : f32
      %120 = vector.broadcast %cst_58 : f32 to vector<4x1xf32>
      %121 = arith.maximumf %119, %120 : vector<4x1xf32>
      %122 = math.log %121 : vector<4x1xf32>
      %cst_59 = arith.constant 0.000000e+00 : f32
      %123 = vector.broadcast %cst_59 : f32 to vector<4x1xf32>
      %124 = arith.subf %123, %122 : vector<4x1xf32>
      %cst_60 = arith.constant 1.000000e-30 : f32
      %125 = vector.broadcast %cst_60 : f32 to vector<8x4xf32>
      %126 = arith.maximumf %110, %125 : vector<8x4xf32>
      %127 = tpu.reciprocal %126 {approx = true} : vector<8x4xf32> -> vector<8x4xf32>
      %cst_61 = arith.constant 1.000000e+00 : f32
      %128 = vector.broadcast %cst_61 : f32 to vector<8x4xf32>
      %129 = arith.subf %128, %109 : vector<8x4xf32>
      %130 = arith.mulf %110, %129 : vector<8x4xf32>
      %131 = arith.mulf %127, %109 : vector<8x4xf32>
      %132 = arith.addf %130, %131 : vector<8x4xf32>
      %cst_62 = arith.constant dense<0.000000e+00> : vector<4x4xf32>
      %133 = tpu.matmul %109, %132, %cst_62 {dimension_numbers = #tpu.dot_dimension_numbers<[0], [0], [1], [1], [0, 1, 1, 1], [], []>} : vector<8x4xf32>, vector<8x4xf32>, vector<4x4xf32> -> vector<4x4xf32>
      %134 = arith.mulf %133, %116 : vector<4x4xf32>
      %cst_63 = arith.constant dense<0.000000e+00> : vector<4xf32>
      %135 = vector.multi_reduction <add>, %134, %cst_63 [1] : vector<4x4xf32> to vector<4xf32>
      %136 = vector.shape_cast %135 : vector<4xf32> to vector<4x1xf32>
      %cst_64 = arith.constant 1.000000e-30 : f32
      %137 = vector.broadcast %cst_64 : f32 to vector<4x1xf32>
      %138 = arith.maximumf %136, %137 : vector<4x1xf32>
      %139 = math.log %138 : vector<4x1xf32>
      %cst_65 = arith.constant 4.000000e-02 : f32
      %140 = vector.broadcast %cst_65 : f32 to vector<4x1xf32>
      %141 = arith.mulf %124, %140 : vector<4x1xf32>
      %cst_66 = arith.constant 4.000000e-02 : f32
      %142 = vector.broadcast %cst_66 : f32 to vector<4x1xf32>
      %143 = arith.mulf %139, %142 : vector<4x1xf32>
      %cst_67 = arith.constant 2.000000e+00 : f32
      %144 = vector.broadcast %cst_67 : f32 to vector<4x1xf32>
      %145 = arith.mulf %144, %143 : vector<4x1xf32>
      %146 = arith.mulf %145, %141 : vector<4x1xf32>
      %147 = arith.addf %141, %143 : vector<4x1xf32>
      %148 = arith.divf %146, %147 : vector<4x1xf32>
      %cst_68 = arith.constant 0.000000e+00 : f32
      %149 = vector.broadcast %cst_68 : f32 to vector<4x1xf32>
      %150 = arith.cmpf olt, %141, %149 : vector<4x1xf32>
      %cst_69 = arith.constant 0.000000e+00 : f32
      %151 = vector.broadcast %cst_69 : f32 to vector<4x1xf32>
      %152 = arith.select %150, %151, %148 : vector<4x1xi1>, vector<4x1xf32>
      %153 = arith.mulf %124, %152 : vector<4x1xf32>
      %cst_70 = arith.constant 1.000000e+00 : f32
      %154 = vector.broadcast %cst_70 : f32 to vector<4x1xf32>
      %155 = arith.subf %154, %152 : vector<4x1xf32>
      %156 = arith.mulf %139, %155 : vector<4x1xf32>
      %157 = arith.addf %153, %156 : vector<4x1xf32>
      %158 = math.exp %157 : vector<4x1xf32>
      %cst_71 = arith.constant dense<0.000000e+00> : vector<4xf32>
      %159 = vector.multi_reduction <add>, %133, %cst_71 [1] : vector<4x4xf32> to vector<4xf32>
      %160 = vector.shape_cast %159 : vector<4xf32> to vector<4x1xf32>
      %161 = arith.addf %158, %160 : vector<4x1xf32>
      %162 = arith.subf %161, %136 : vector<4x1xf32>
      %cst_72 = arith.constant 9.99999996E-13 : f32
      %163 = vector.broadcast %cst_72 : f32 to vector<4x1xf32>
      %164 = arith.maximumf %162, %163 : vector<4x1xf32>
      %165 = tpu.reciprocal %164 {approx = true} : vector<4x1xf32> -> vector<4x1xf32>
      %166 = arith.mulf %158, %165 : vector<4x1xf32>
      %167 = math.log %166 : vector<4x1xf32>
      %cst_73 = arith.constant dense<0.000000e+00> : vector<1xf32>
      %168 = vector.multi_reduction <add>, %167, %cst_73 [0] : vector<4x1xf32> to vector<1xf32>
      %169 = vector.shape_cast %168 : vector<1xf32> to vector<1x1xf32>
      %cst_74 = arith.constant -2.500000e-01 : f32
      %170 = vector.broadcast %cst_74 : f32 to vector<1x1xf32>
      %171 = arith.mulf %170, %169 : vector<1x1xf32>
      %cst_75 = arith.constant 5.000000e-01 : f32
      %172 = vector.broadcast %cst_75 : f32 to vector<1x1xf32>
      %173 = arith.mulf %172, %84 : vector<1x1xf32>
      %cst_76 = arith.constant 3.000000e-01 : f32
      %174 = vector.broadcast %cst_76 : f32 to vector<1x1xf32>
      %175 = arith.mulf %174, %171 : vector<1x1xf32>
      %176 = arith.addf %173, %175 : vector<1x1xf32>
      %c0_77 = arith.constant 0 : index
      %c0_78 = arith.constant 0 : index
      %177 = vector.load %arg12[%c0_77, %c0_78] : memref<1x1xf32, #tpu.memory_space<vmem>>, vector<1x1xf32>
      tpu.vector_store %arg12[%c0_77, %c0_78], %176 {strides = array<i32>} : memref<1x1xf32, #tpu.memory_space<vmem>>, vector<1x1xf32>,
    } else {
    }
    %c0 = arith.constant 0 : index
    %c0_1 = arith.constant 0 : index
    %3 = vector.load %arg7[%c0, %c0_1] : memref<8x4xf32, #tpu.memory_space<vmem>>, vector<8x4xf32>
    %cst = arith.constant dense<0xFF800000> : vector<8xf32>
    %4 = vector.multi_reduction <maximumf>, %3, %cst [1] : vector<8x4xf32> to vector<8xf32>
    %5 = vector.shape_cast %4 : vector<8xf32> to vector<8x1xf32>
    %c0_2 = arith.constant 0 : index
    %c0_3 = arith.constant 0 : index
    %6 = vector.load %arg9[%c0_2, %c0_3] : memref<8x1xf32, #tpu.memory_space<vmem>>, vector<8x1xf32>
    %7 = arith.maximumf %6, %5 : vector<8x1xf32>
    %c0_4 = arith.constant 0 : index
    %c0_5 = arith.constant 0 : index
    %8 = vector.load %arg10[%c0_4, %c0_5] : memref<8x1xf32, #tpu.memory_space<vmem>>, vector<8x1xf32>
    %c0_6 = arith.constant 0 : index
    %c0_7 = arith.constant 0 : index
    %9 = vector.load %arg9[%c0_6, %c0_7] : memref<8x1xf32, #tpu.memory_space<vmem>>, vector<8x1xf32>
    %10 = arith.subf %9, %7 : vector<8x1xf32>
    %11 = math.exp %10 : vector<8x1xf32>
    %12 = arith.mulf %8, %11 : vector<8x1xf32>
    %13 = vector.broadcast %7 : vector<8x1xf32> to vector<8x4xf32>
    %14 = arith.subf %3, %13 : vector<8x4xf32>
    %15 = math.exp %14 : vector<8x4xf32>
    %cst_8 = arith.constant dense<0.000000e+00> : vector<8xf32>
    %16 = vector.multi_reduction <add>, %15, %cst_8 [1] : vector<8x4xf32> to vector<8xf32>
    %17 = vector.shape_cast %16 : vector<8xf32> to vector<8x1xf32>
    %18 = arith.addf %12, %17 : vector<8x1xf32>
    %c0_9 = arith.constant 0 : index
    %c0_10 = arith.constant 0 : index
    %19 = vector.load %arg10[%c0_9, %c0_10] : memref<8x1xf32, #tpu.memory_space<vmem>>, vector<8x1xf32>
    tpu.vector_store %arg10[%c0_9, %c0_10], %18 {strides = array<i32>} : memref<8x1xf32, #tpu.memory_space<vmem>>, vector<8x1xf32>,
    %c0_11 = arith.constant 0 : index
    %c0_12 = arith.constant 0 : index
    %20 = vector.load %arg9[%c0_11, %c0_12] : memref<8x1xf32, #tpu.memory_space<vmem>>, vector<8x1xf32>
    tpu.vector_store %arg9[%c0_11, %c0_12], %7 {strides = array<i32>} : memref<8x1xf32, #tpu.memory_space<vmem>>, vector<8x1xf32>,
    %c4_i32 = arith.constant 4 : i32
    %21 = arith.muli %arg0, %c4_i32 : i32
    %22 = tpu.iota {dimensions = array<i32: 1>} : vector<8x4xi32>
    %23 = vector.broadcast %21 : i32 to vector<8x4xi32>
    %24 = arith.addi %23, %22 : vector<8x4xi32>
    %c0_13 = arith.constant 0 : index
    %c0_14 = arith.constant 0 : index
    %25 = vector.load %arg3[%c0_13, %c0_14] : memref<8x1xi32, #tpu.memory_space<vmem>>, vector<8x1xi32>
    %26 = vector.broadcast %25 : vector<8x1xi32> to vector<8x4xi32>
    %27 = arith.cmpi eq, %24, %26 : vector<8x4xi32>
    %c0_15 = arith.constant 0 : index
    %c0_16 = arith.constant 0 : index
    %28 = vector.load %arg11[%c0_15, %c0_16] : memref<8x1xf32, #tpu.memory_space<vmem>>, vector<8x1xf32>
    %cst_17 = arith.constant 0.000000e+00 : f32
    %29 = vector.broadcast %cst_17 : f32 to vector<8x4xf32>
    %30 = arith.select %27, %3, %29 : vector<8x4xi1>, vector<8x4xf32>
    %cst_18 = arith.constant dense<0.000000e+00> : vector<8xf32>
    %31 = vector.multi_reduction <add>, %30, %cst_18 [1] : vector<8x4xf32> to vector<8xf32>
    %32 = vector.shape_cast %31 : vector<8xf32> to vector<8x1xf32>
    %33 = arith.addf %28, %32 : vector<8x1xf32>
    %c0_19 = arith.constant 0 : index
    %c0_20 = arith.constant 0 : index
    %34 = vector.load %arg11[%c0_19, %c0_20] : memref<8x1xf32, #tpu.memory_space<vmem>>, vector<8x1xf32>
    tpu.vector_store %arg11[%c0_19, %c0_20], %33 {strides = array<i32>} : memref<8x1xf32, #tpu.memory_space<vmem>>, vector<8x1xf32>,
    %c0_i32_21 = arith.constant 0 : i32
    %35 = arith.cmpi eq, %arg0, %c0_i32_21 : i32
    %36 = arith.extui %35 : i1 to i32
    %c0_i32_22 = arith.constant 0 : i32
    %37 = arith.cmpi ne, %36, %c0_i32_22 : i32
    scf.if %37 {
      %c0_23 = arith.constant 0 : index
      %c0_24 = arith.constant 0 : index
      %38 = vector.load %arg9[%c0_23, %c0_24] : memref<8x1xf32, #tpu.memory_space<vmem>>, vector<8x1xf32>
      %c0_25 = arith.constant 0 : index
      %c0_26 = arith.constant 0 : index
      %39 = vector.load %arg10[%c0_25, %c0_26] : memref<8x1xf32, #tpu.memory_space<vmem>>, vector<8x1xf32>
      %40 = math.log %39 : vector<8x1xf32>
      %41 = arith.addf %38, %40 : vector<8x1xf32>
      %c0_27 = arith.constant 0 : index
      %c0_28 = arith.constant 0 : index
      %42 = vector.load %arg11[%c0_27, %c0_28] : memref<8x1xf32, #tpu.memory_space<vmem>>, vector<8x1xf32>
      %43 = arith.subf %41, %42 : vector<8x1xf32>
      %cst_29 = arith.constant dense<0.000000e+00> : vector<1xf32>
      %44 = vector.multi_reduction <add>, %43, %cst_29 [0] : vector<8x1xf32> to vector<1xf32>
      %45 = vector.shape_cast %44 : vector<1xf32> to vector<1x1xf32>
      %cst_30 = arith.constant 1.250000e-01 : f32
      %46 = vector.broadcast %cst_30 : f32 to vector<1x1xf32>
      %47 = arith.mulf %45, %46 : vector<1x1xf32>
      %c0_31 = arith.constant 0 : index
      %c0_32 = arith.constant 0 : index
      %48 = vector.load %arg12[%c0_31, %c0_32] : memref<1x1xf32, #tpu.memory_space<vmem>>, vector<1x1xf32>
      %cst_33 = arith.constant 2.000000e-01 : f32
      %49 = vector.broadcast %cst_33 : f32 to vector<1x1xf32>
      %50 = arith.mulf %49, %47 : vector<1x1xf32>
      %51 = arith.addf %48, %50 : vector<1x1xf32>
      %c0_34 = arith.constant 0 : index
      %c0_35 = arith.constant 0 : index
      %52 = vector.load %arg8[%c0_34, %c0_35] : memref<1x1xf32, #tpu.memory_space<vmem>>, vector<1x1xf32>
      tpu.vector_store %arg8[%c0_34, %c0_35], %51 {strides = array<i32>} : memref<1x1xf32, #tpu.memory_space<vmem>>, vector<1x1xf32>,
    } else {
    }
    return
  }
  func.func @transform_0(%arg0: i32) -> (i32, i32) {
    %c0_i32 = arith.constant 0 : i32
    %c0_i32_0 = arith.constant 0 : i32
    %c0_i32_1 = arith.constant 0 : i32
    return %c0_i32, %c0_i32_0 : i32, i32
  }
  func.func @transform_1(%arg0: i32) -> (i32, i32) {
    %c0_i32 = arith.constant 0 : i32
    %c0_i32_0 = arith.constant 0 : i32
    %c0_i32_1 = arith.constant 0 : i32
    return %c0_i32, %c0_i32_0 : i32, i32
  }
  func.func @transform_2(%arg0: i32) -> (i32, i32) {
    %c0_i32 = arith.constant 0 : i32
    %c0_i32_0 = arith.constant 0 : i32
    %c0_i32_1 = arith.constant 0 : i32
    return %c0_i32, %c0_i32_0 : i32, i32
  }
  func.func @transform_3(%arg0: i32) -> (i32, i32) {
    %c0_i32 = arith.constant 0 : i32
    %c0_i32_0 = arith.constant 0 : i32
    %c0_i32_1 = arith.constant 0 : i32
    return %c0_i32, %c0_i32_0 : i32, i32
  }
  func.func @transform_4(%arg0: i32) -> (i32, i32) {
    %c0_i32 = arith.constant 0 : i32
    %c0_i32_0 = arith.constant 0 : i32
    %c0_i32_1 = arith.constant 0 : i32
    return %c0_i32, %c0_i32_0 : i32, i32
  }
  func.func @transform_5(%arg0: i32) -> (i32, i32) {
    %c0_i32 = arith.constant 0 : i32
    %c0_i32_0 = arith.constant 0 : i32
    %c0_i32_1 = arith.constant 0 : i32
    return %c0_i32, %c0_i32_0 : i32, i32
  }
  func.func @transform_6(%arg0: i32) -> (i32, i32) {
    %c0_i32 = arith.constant 0 : i32
    %c0_i32_0 = arith.constant 0 : i32
    return %c0_i32, %arg0 : i32, i32
  }
  func.func @transform_7(%arg0: i32) -> (i32, i32) {
    %c0_i32 = arith.constant 0 : i32
    %c0_i32_0 = arith.constant 0 : i32
    %c0_i32_1 = arith.constant 0 : i32
    return %c0_i32, %c0_i32_0 : i32, i32
  }
}

</mosaic_0001>

<llo_original>
// kernel: tpu_custom_call.1
$region0: #{tpu_custom_call.1}
  #allocation0 [shape = 'u32[]', space=smem, size = 0x4, offset = 0x4, fixed_abs, tag = 'smem constant byte address 0x4 - core index']
  #allocation1 [shape = 'u32[72,128]{1,0:T(1,128)}', space=vmem, size = 0x9000, scoped, tag = 'internal scratch']
  #allocation2 [shape = 'f32[8,1]{1,0:T(8,128)}', space=vmem, size = 0x1000, scoped, tag = 'scratch operand']
  #allocation3 [shape = 'f32[8,1]{1,0:T(8,128)}', space=vmem, size = 0x1000, scoped, tag = 'scratch operand']
  #allocation4 [shape = 'f32[8,1]{1,0:T(8,128)}', space=vmem, size = 0x1000, scoped, tag = 'scratch operand']
  #allocation5 [shape = 'f32[1,1]{1,0:T(1,128)}', space=vmem, size = 0x200, scoped, tag = 'scratch operand']
  %s0 = inlined_call_operand.vmem [shape: s32[8,1], index: 0, kind: input, shape index: {}]
  %s1 = inlined_call_operand.vmem [shape: s32[1,8], index: 1, kind: input, shape index: {}]
  %s2 = inlined_call_operand.vmem [shape: s32[8,1], index: 2, kind: input, shape index: {}]
  %s3 = inlined_call_operand.vmem [shape: f32[8,1], index: 3, kind: input, shape index: {}]
  %s4 = inlined_call_operand.vmem [shape: f32[1,8], index: 4, kind: input, shape index: {}]
  %s5 = inlined_call_operand.vmem [shape: f32[8,32], index: 5, kind: input, shape index: {}]
  %s6 = inlined_call_operand.vmem [shape: f32[8,4], index: 6, kind: input, shape index: {}]
  %s7 = inlined_call_operand.hbm [shape: f32[1,1], index: 7, kind: output, shape index: {}]
  %s8 = sld [smem:[#allocation0]]
  $region46: #{tpu_custom_call.1} parent=0
    _
  %s10 = ssub.s32 1, %s8
  %s11 = scalar_select 0, %s10, %s8
  $region1: #{tpu_custom_call.1} parent=0
    #allocation6 [shape = 'u8[512]{0}', space=vmem, size = 0x400, scoped, tag = 'output window, operand 0, single buffered']
    #allocation7 [shape = 's32[1]{0}', space=sflag, size = 0x4, scoped, tag = 'scoped memory for tpu_custom_call.1']
    %12 = vsyncpa [#allocation7], 0
    // Predicated region
    $region2: #{tpu_custom_call.1} parent=1 // pred_check
      _
    $region3: #{tpu_custom_call.1} parent=1 // pred_check_branch
      %14 = sbr.rel (0) target = $region5
    $region4: #{tpu_custom_call.1} parent=1 // pred_region
      _
    $region5: #{tpu_custom_call.1} parent=1 // pred_fallthru
      _
    // Predicated region
    $region6: #{tpu_custom_call.1} parent=1 // pred_check
      _
    $region7: #{tpu_custom_call.1} parent=1 // pred_check_branch
      %16 = sbr.rel (0) target = $region9
    $region8: #{tpu_custom_call.1} parent=1 // pred_region
      _
    $region9: #{tpu_custom_call.1} parent=1 // pred_fallthru
      _
    // Predicated region
    $region10: #{tpu_custom_call.1} parent=1 // pred_check
      _
    $region11: #{tpu_custom_call.1} parent=1 // pred_check_branch
      %18 = sbr.rel (0) target = $region13
    $region12: #{tpu_custom_call.1} parent=1 // pred_region
      _
    $region13: #{tpu_custom_call.1} parent=1 // pred_fallthru
      _
    // Predicated region
    $region14: #{tpu_custom_call.1} parent=1 // pred_check
      _
    $region15: #{tpu_custom_call.1} parent=1 // pred_check_branch
      %20 = sbr.rel (0) target = $region17
    $region16: #{tpu_custom_call.1} parent=1 // pred_region
      _
    $region17: #{tpu_custom_call.1} parent=1 // pred_fallthru
      _
    // Predicated region
    $region18: #{tpu_custom_call.1} parent=1 // pred_check
      _
    $region19: #{tpu_custom_call.1} parent=1 // pred_check_branch
      %22 = sbr.rel (0) target = $region21
    $region20: #{tpu_custom_call.1} parent=1 // pred_region
      _
    $region21: #{tpu_custom_call.1} parent=1 // pred_fallthru
      _
    // Predicated region
    $region22: #{tpu_custom_call.1} parent=1 // pred_check
      _
    $region23: #{tpu_custom_call.1} parent=1 // pred_check_branch
      %24 = sbr.rel (0) target = $region25
    $region24: #{tpu_custom_call.1} parent=1 // pred_region
      _
    $region25: #{tpu_custom_call.1} parent=1 // pred_fallthru
      _
    // Predicated region
    $region26: #{tpu_custom_call.1} parent=1 // pred_check
      _
    $region27: #{tpu_custom_call.1} parent=1 // pred_check_branch
      %26 = sbr.rel (0) target = $region29
    $region28: #{tpu_custom_call.1} parent=1 // pred_region
      _
    $region29: #{tpu_custom_call.1} parent=1 // pred_fallthru
      _
    %p27 = scmp.eq.s32.totalorder 0, 0
    // Predicated region
    $region30: #{tpu_custom_call.1} parent=1 // pred_check
      %p28 = pneg %p27
    $region31: #{tpu_custom_call.1} parent=1 // pred_check_branch
      %30 = sbr.rel (%p28) target = $region33
    $region32: #{tpu_custom_call.1} parent=1 // pred_region
      %vm31 = vcmask 7168
      %32 = vst.msk [vmem:[#allocation2] sm:$0xff] %vm31, -1e+30
      %33 = vst.msk [vmem:[#allocation3] sm:$0xff] %vm31, 0.0
      %34 = vst.msk [vmem:[#allocation4] sm:$0xff] %vm31, 0.0
      %v35 = vld [vmem:[%s5] sm:$0xff]
      %vm36 = vcmask 261120
      %v38 = vsel %vm36, %v35, 0
      %40 = vmatpush.xpose.msra.mxu0 0.0
      %41 = vmatpush.xpose.msra.mxu0 0.0
      %42 = vmatpush.xpose.msra.mxu0 0.0
      %43 = vmatpush.xpose.msra.mxu0 0.0
      %44 = vmatpush.xpose.msra.mxu0 0.0
      %45 = vmatpush.xpose.msra.mxu0 0.0
      %46 = vmatpush.xpose.msra.mxu0 0.0
      %47 = vmatpush.xpose.msra.mxu0 0.0
      %48 = vmatpush.xpose.msra.mxu0 0.0
      %49 = vmatpush.xpose.msra.mxu0 0.0
      %50 = vmatpush.xpose.msra.mxu0 0.0
      %51 = vmatpush.xpose.msra.mxu0 0.0
      %52 = vmatpush.xpose.msra.mxu0 0.0
      %53 = vmatpush.xpose.msra.mxu0 0.0
      %54 = vmatpush.xpose.msra.mxu0 0.0
      %55 = vmatpush.xpose.msra.mxu0 %v38
      %56 = vmatmul.f32.gmra.mxu0 %v38
      %v57 = vpop.f32.mrf.mxu0
      %v58 = vadd.f32 0.0, %v57
      %59 = vdwg.mxu0
      %v60 = vld [vmem:[%s0] sm:$0xff]
      %v61 = vld [vmem:[%s1] sm:$0x1]
      %62 = vset.pattern.permute.xlu0 0
      %63 = vperm.xlu0 %62, %v60
      %v64 = vpop.permute.xlu0 %63
      %v65 = vperm.slane %v61, 0
      %vm66 = vcmp.eq.s32.totalorder %v64, %v65
      %v67 = vsel %vm66, 1, 0
      %v68 = vcvt.s32.f32 %v67
      %v69 = vlaneseq
      %v70 = vshrl.u32 %v69, 7
      %v71 = vlaneseq
      %v72 = vand.u32 %v71, 127
      %vm73 = vcmp.ne.s32.totalorder %v70, %v72
      %v74 = vsel %vm73, 1, 0
      %v75 = vcvt.s32.f32 %v74
      %v76 = vmul.f32 %v68, %v75
      %v77 = vmul.f32 %v58, 14.285714
      %vm78 = vcmask 64512
      %v79 = vsel %vm78, %v77, -inf
      %80 = vmax.xlane.f32.xlu0 %v79
      %v81 = vpop.xlane.xlu0 %80
      %v82 = vsub.f32 %v77, %v81
      %v83 = vmul.f32 %v82, 1.442695
      %v84 = vpow.pop %v83
      %v85 = vmul.f32 %v84, %v75
      %v86 = vsel %vm78, %v85, 0.0
      %87 = vadd.xlane.f32.xlu0 %v86
      %v88 = vpop.xlane.xlu0 %87
      %v89 = vlog2.pop %v88
      %v90 = vmul.f32 %v89, 0.6931472
      %v91 = vsub.f32 %v82, %v90
      %v92 = vsel %vm78, %v76, 0.0
      %93 = vadd.xlane.f32.xlu0 %v92
      %v94 = vpop.xlane.xlu0 %93
      %v95 = vmul.f32 %v76, %v91
      %v96 = vsel %vm78, %v95, 0.0
      %97 = vadd.xlane.f32.xlu0 %v96
      %v98 = vpop.xlane.xlu0 %97
      %v99 = vmax.f32 %v94, 1.0
      %v100 = vrcp.pop %v99
      %v101 = vmul.f32 %v98, %v100
      %v102 = vrot.slane %v101, 4
      %v103 = vadd.f32 %v101, %v102
      %v104 = vrot.slane %v103, 2
      %v105 = vadd.f32 %v103, %v104
      %v106 = vrot.slane %v105, 1
      %v107 = vadd.f32 %v105, %v106
      %v108 = vmul.f32 %v107, -0.125
      %v109 = vld [vmem:[%s3] sm:$0xff]
      %111 = vset.pattern.permute.xlu0 0
      %112 = vperm.xlu0 %111, %v109
      %v113 = vpop.permute.xlu0 %112
      %v115 = vmul.f32 %v58, %v113
      %v116 = vld [vmem:[%s4] sm:$0x1]
      %v118 = vperm.slane %v116, 0
      %v120 = vmul.f32 %v115, %v118
      %v121 = vmul.f32 %v120, 25.0
      %v122 = vmul.f32 %v68, 2.0
      %v123 = vsub.f32 1.0, %v122
      %v124 = vmul.f32 %v121, %v123
      %v125 = vmul.f32 %v124, 1.442695
      %v126 = vpow.pop %v125
      %v127 = vmul.u32 %v72, 2
      %vm128 = vcmp.ge.s32.totalorder %v70, %v127
      %v129 = vadd.s32 %v127, 2
      %vm130 = vcmp.lt.s32.totalorder %v70, %v129
      %vm131 = vmand %vm128, %vm130
      %v132 = vsel %vm131, 1, 0
      %v133 = vcvt.s32.f32 %v132
      %v135 = vsel %vm78, %v126, 0
      %137 = vmatpush.msra.mxu0 0.0
      %138 = vmatpush.msra.mxu0 0.0
      %139 = vmatpush.msra.mxu0 0.0
      %140 = vmatpush.msra.mxu0 0.0
      %141 = vmatpush.msra.mxu0 0.0
      %142 = vmatpush.msra.mxu0 0.0
      %143 = vmatpush.msra.mxu0 0.0
      %144 = vmatpush.msra.mxu0 0.0
      %145 = vmatpush.msra.mxu0 0.0
      %146 = vmatpush.msra.mxu0 0.0
      %147 = vmatpush.msra.mxu0 0.0
      %148 = vmatpush.msra.mxu0 0.0
      %149 = vmatpush.msra.mxu0 0.0
      %150 = vmatpush.msra.mxu0 0.0
      %151 = vmatpush.msra.mxu0 0.0
      %152 = vmatpush.msra.mxu0 %v133
      %153 = vmatmul.f32.gmra.mxu0 %v135
      %v154 = vpop.f32.mrf.mxu0
      %v155 = vadd.f32 0.0, %v154
      %156 = vdwg.mxu0
      %157 = vxpose.xlu0.b32.start [1/16] %v133, 128
      %158 = vxpose.xlu0.b32.cont [2/16] 0.0, 128
      %159 = vxpose.xlu0.b32.cont [3/16] 0.0, 128
      %160 = vxpose.xlu0.b32.cont [4/16] 0.0, 128
      %161 = vxpose.xlu0.b32.cont [5/16] 0.0, 128
      %162 = vxpose.xlu0.b32.cont [6/16] 0.0, 128
      %163 = vxpose.xlu0.b32.cont [7/16] 0.0, 128
      %164 = vxpose.xlu0.b32.cont [8/16] 0.0, 128
      %165 = vxpose.xlu0.b32.cont [9/16] 0.0, 128
      %166 = vxpose.xlu0.b32.cont [10/16] 0.0, 128
      %167 = vxpose.xlu0.b32.cont [11/16] 0.0, 128
      %168 = vxpose.xlu0.b32.cont [12/16] 0.0, 128
      %169 = vxpose.xlu0.b32.cont [13/16] 0.0, 128
      %170 = vxpose.xlu0.b32.cont [14/16] 0.0, 128
      %171 = vxpose.xlu0.b32.cont [15/16] 0.0, 128
      %172 = vxpose.xlu0.b32.end [16/16] 0.0, 128
      %v173 = vpop.trf.xlu0
      %v174 = vpop.trf.xlu0
      %v175 = vpop.trf.xlu0
      %v176 = vpop.trf.xlu0
      %v177 = vpop.trf.xlu0
      %v178 = vpop.trf.xlu0
      %v179 = vpop.trf.xlu0
      %v180 = vpop.trf.xlu0
      %v181 = vpop.trf.xlu0
      %v182 = vpop.trf.xlu0
      %v183 = vpop.trf.xlu0
      %v184 = vpop.trf.xlu0
      %v185 = vpop.trf.xlu0
      %v186 = vpop.trf.xlu0
      %v187 = vpop.trf.xlu0
      %v188 = vpop.trf.xlu0
      %v190 = vsel %vm78, %v173, 0
      %192 = vmatpush.msra.mxu0 0.0
      %193 = vmatpush.msra.mxu0 0.0
      %194 = vmatpush.msra.mxu0 0.0
      %195 = vmatpush.msra.mxu0 0.0
      %196 = vmatpush.msra.mxu0 0.0
      %197 = vmatpush.msra.mxu0 0.0
      %198 = vmatpush.msra.mxu0 0.0
      %199 = vmatpush.msra.mxu0 0.0
      %200 = vmatpush.msra.mxu0 0.0
      %201 = vmatpush.msra.mxu0 0.0
      %202 = vmatpush.msra.mxu0 0.0
      %203 = vmatpush.msra.mxu0 0.0
      %204 = vmatpush.msra.mxu0 0.0
      %205 = vmatpush.msra.mxu0 0.0
      %206 = vmatpush.msra.mxu0 0.0
      %207 = vmatpush.msra.mxu0 %v155
      %208 = vmatmul.f32.gmra.mxu0 %v190
      %v209 = vpop.f32.mrf.mxu0
      %v210 = vadd.f32 0.0, %v209
      %211 = vdwg.mxu0
      %vm212 = vcmp.eq.s32.totalorder %v70, %v72
      %v213 = vsel %vm212, 1, 0
      %v214 = vcvt.s32.f32 %v213
      %v215 = vmul.f32 %v210, %v214
      %vm216 = vcmask 27648
      %v217 = vsel %vm216, %v215, 0.0
      %218 = vadd.xlane.f32.xlu0 %v217
      %v219 = vpop.xlane.xlu0 %218
      %v220 = vmax.f32 %v219, 1e-30
      %v221 = vlog2.pop %v220
      %v222 = vmul.f32 %v221, 0.6931472
      %v223 = vsub.f32 0.0, %v222
      %v224 = vmax.f32 %v155, 1e-30
      %v225 = vrcp.pop %v224
      %v226 = vsub.f32 1.0, %v133
      %v227 = vmul.f32 %v155, %v226
      %v228 = vmul.f32 %v225, %v133
      %v229 = vadd.f32 %v227, %v228
      %230 = vmatpush.msra.mxu0 0.0
      %231 = vmatpush.msra.mxu0 0.0
      %232 = vmatpush.msra.mxu0 0.0
      %233 = vmatpush.msra.mxu0 0.0
      %234 = vmatpush.msra.mxu0 0.0
      %235 = vmatpush.msra.mxu0 0.0
      %236 = vmatpush.msra.mxu0 0.0
      %237 = vmatpush.msra.mxu0 0.0
      %238 = vmatpush.msra.mxu0 0.0
      %239 = vmatpush.msra.mxu0 0.0
      %240 = vmatpush.msra.mxu0 0.0
      %241 = vmatpush.msra.mxu0 0.0
      %242 = vmatpush.msra.mxu0 0.0
      %243 = vmatpush.msra.mxu0 0.0
      %244 = vmatpush.msra.mxu0 0.0
      %245 = vmatpush.msra.mxu0 %v229
      %246 = vmatmul.f32.gmra.mxu0 %v190
      %v247 = vpop.f32.mrf.mxu0
      %v248 = vadd.f32 0.0, %v247
      %249 = vdwg.mxu0
      %v250 = vmul.f32 %v248, %v214
      %v251 = vsel %vm216, %v250, 0.0
      %252 = vadd.xlane.f32.xlu0 %v251
      %v253 = vpop.xlane.xlu0 %252
      %v254 = vmax.f32 %v253, 1e-30
      %v255 = vlog2.pop %v254
      %v256 = vmul.f32 %v255, 0.6931472
      %v257 = vmul.f32 %v223, 0.04
      %v258 = vmul.f32 %v256, 0.04
      %v259 = vmul.f32 %v258, 2.0
      %v260 = vmul.f32 %v259, %v257
      %v261 = vadd.f32 %v257, %v258
      %v262 = vrcp.pop %v261
      %v263 = vmul.f32 %v261, %v262
      %v264 = vsub.f32 1.0, %v263
      %v265 = vmul.f32 %v262, %v264
      %v266 = vadd.f32 %v262, %v265
      %vm267 = vweird.f32 %v261
      %vm268 = vweird.f32 %v262
      %vm269 = vmor %vm267, %vm268
      %v270 = vsel %vm269, %v262, %v266
      %v271 = vand.u32 2147483647, %v261
      %vm272 = vcmp.eq.f32.partialorder %v271, 8.507059e+37
      %v273 = vand.u32 %v261, 2147483648
      %v274 = vor.u32 1.1754944e-38, %v273
      %v275 = vsel %vm272, %v274, %v270
      %v276 = vmul.f32 %v260, %v275
      %vm277 = vcmp.lt.f32.partialorder %v257, 0.0
      %v278 = vsel %vm277, 0.0, %v276
      %v279 = vmul.f32 %v223, %v278
      %v280 = vsub.f32 1.0, %v278
      %v281 = vmul.f32 %v256, %v280
      %v282 = vadd.f32 %v279, %v281
      %v283 = vmul.f32 %v282, 1.442695
      %v284 = vpow.pop %v283
      %v285 = vsel %vm216, %v248, 0.0
      %286 = vadd.xlane.f32.xlu0 %v285
      %v287 = vpop.xlane.xlu0 %286
      %v288 = vadd.f32 %v284, %v287
      %v289 = vsub.f32 %v288, %v253
      %v290 = vmax.f32 %v289, 1e-12
      %v291 = vrcp.pop %v290
      %v292 = vmul.f32 %v284, %v291
      %v293 = vlog2.pop %v292
      %v294 = vmul.f32 %v293, 0.6931472
      %vm295 = vcmask 1043456
      %v296 = vsel %vm295, %v294, 0.0
      %v297 = vrot.slane %v296, 4
      %v298 = vadd.f32 %v296, %v297
      %v299 = vrot.slane %v298, 2
      %v300 = vadd.f32 %v298, %v299
      %v301 = vrot.slane %v300, 1
      %v302 = vadd.f32 %v300, %v301
      %v303 = vmul.f32 %v302, -0.25
      %v304 = vmul.f32 %v108, 0.5
      %v305 = vmul.f32 %v303, 0.3
      %v306 = vadd.f32 %v304, %v305
      %vm307 = vcmask 0
      %308 = vst.msk [vmem:[#allocation5] sm:$0x1] %vm307, %v306
    $region33: #{tpu_custom_call.1} parent=1 // pred_fallthru
      _
    %v309 = vld [vmem:[%s6] sm:$0xff]
    %vm310 = vcmask 31744
    %v311 = vsel %vm310, %v309, -inf
    %312 = vmax.xlane.f32.xlu0 %v311
    %v313 = vpop.xlane.xlu0 %312
    %v314 = vld [vmem:[#allocation2] sm:$0xff]
    %v315 = vmax.f32 %v314, %v313
    %v316 = vld [vmem:[#allocation3] sm:$0xff]
    %v317 = vsub.f32 %v314, %v315
    %v318 = vmul.f32 %v317, 1.442695
    %v319 = vpow.pop %v318
    %v320 = vmul.f32 %v316, %v319
    %322 = vset.pattern.permute.xlu0 0
    %323 = vperm.xlu0 %322, %v315
    %v324 = vpop.permute.xlu0 %323
    %v326 = vsub.f32 %v309, %v324
    %v327 = vmul.f32 %v326, 1.442695
    %v328 = vpow.pop %v327
    %v329 = vsel %vm310, %v328, 0.0
    %330 = vadd.xlane.f32.xlu0 %v329
    %v331 = vpop.xlane.xlu0 %330
    %v332 = vadd.f32 %v320, %v331
    %vm333 = vcmask 7168
    %334 = vst.msk [vmem:[#allocation3] sm:$0xff] %vm333, %v332
    %335 = vst.msk [vmem:[#allocation2] sm:$0xff] %vm333, %v315
    %s336 = smul.u32 0, 4
    %v337 = vlaneseq
    %v338 = vand.u32 %v337, 127
    %v339 = vstv %s336
    %v340 = vadd.s32 %v339, %v338
    %v341 = vld [vmem:[%s2] sm:$0xff]
    %342 = vset.pattern.permute.xlu0 0
    %343 = vperm.xlu0 %342, %v341
    %v344 = vpop.permute.xlu0 %343
    %vm345 = vcmp.eq.s32.totalorder %v340, %v344
    %v346 = vld [vmem:[#allocation4] sm:$0xff]
    %v347 = vsel %vm345, %v309, 0.0
    %v348 = vsel %vm310, %v347, 0.0
    %349 = vadd.xlane.f32.xlu0 %v348
    %v350 = vpop.xlane.xlu0 %349
    %v351 = vadd.f32 %v346, %v350
    %352 = vst.msk [vmem:[#allocation4] sm:$0xff] %vm333, %v351
    // Predicated region
    $region34: #{tpu_custom_call.1} parent=1 // pred_check
      %p353 = pneg %p27
    $region35: #{tpu_custom_call.1} parent=1 // pred_check_branch
      %355 = sbr.rel (%p353) target = $region37
    $region36: #{tpu_custom_call.1} parent=1 // pred_region
      %v356 = vld [vmem:[#allocation2] sm:$0xff]
      %v357 = vld [vmem:[#allocation3] sm:$0xff]
      %v358 = vlog2.pop %v357
      %v359 = vmul.f32 %v358, 0.6931472
      %v360 = vadd.f32 %v356, %v359
      %v361 = vld [vmem:[#allocation4] sm:$0xff]
      %v362 = vsub.f32 %v360, %v361
      %v363 = vsel %vm333, %v362, 0.0
      %v364 = vrot.slane %v363, 4
      %v365 = vadd.f32 %v363, %v364
      %v366 = vrot.slane %v365, 2
      %v367 = vadd.f32 %v365, %v366
      %v368 = vrot.slane %v367, 1
      %v369 = vadd.f32 %v367, %v368
      %v370 = vmul.f32 %v369, 0.125
      %v371 = vld [vmem:[#allocation5] sm:$0x1]
      %v372 = vmul.f32 %v370, 0.2
      %v373 = vadd.f32 %v371, %v372
      %vm374 = vcmask 0
      %375 = vst.msk [vmem:[#allocation6] sm:$0x1] %vm374, %v373
    $region37: #{tpu_custom_call.1} parent=1 // pred_fallthru
      _
    // Predicated region
    $region38: #{tpu_custom_call.1} parent=1 // pred_check
      _
    $region39: #{tpu_custom_call.1} parent=1 // pred_check_branch
      %377 = sbr.rel (0) target = $region41
    $region40: #{tpu_custom_call.1} parent=1 // pred_region
      %379 = vsyncadd [#allocation7], 0
      %s381 = sshll.u32 [#allocation6], 4
      %s382 = int_to_ptr.vmem [resolvable:$true] %s381
      %s383 = sshll.u32 %s7, 4
      %s384 = int_to_ptr.hbm [resolvable:$true] %s383
      %386 = dma.vmem_to_hbm [thread:$0]  %s382, 16, %s384, [#allocation7]
    $region41: #{tpu_custom_call.1} parent=1 // pred_fallthru
      _
    // Predicated region
    $region42: #{tpu_custom_call.1} parent=1 // pred_check
      _
    $region43: #{tpu_custom_call.1} parent=1 // pred_check_branch
      %388 = sbr.rel (0) target = $region45
    $region44: #{tpu_custom_call.1} parent=1 // pred_region
      %390 = dma.done [#allocation7], 16
    $region45: #{tpu_custom_call.1} parent=1 // pred_fallthru
      _
    %391 = vsyncpa [#allocation7], 1

</llo_original>
